<compile_context>
chip_gen: v5e
topology: v5e:2x2
jax: 0.10.0
libtpu: 0.0.40
codegen_flags: <defaults>
</compile_context>

<pallas_src>
import functools

import numpy as np
import jax
import jax.numpy as jnp
from jax.experimental import pallas as pl
from jax.experimental.pallas import tpu as pltpu


# Gray conversion coefficients, computed exactly like the PyTorch module:
# FloatTensor([65.738, 129.057, 25.064]) / 256
_GRAY = (
    float(np.float32(65.738) / np.float32(256.0)),
    float(np.float32(129.057) / np.float32(256.0)),
    float(np.float32(25.064) / np.float32(256.0)),
)


# ---------------------------------------------------------------------------
# Fused Pallas kernel: gray conversion + 4 directional 3x3 filters.
# ---------------------------------------------------------------------------
def _asl_kernel(xp_ref, v_ref, h_ref, lu_ref, rd_ref, *, H, W, to_gray):
    # xp_ref block: (1, C, H+2, W+2) zero-padded input for one batch element.
    if to_gray:
        gp = (xp_ref[0, 0, :, :] * _GRAY[0]
              + xp_ref[0, 1, :, :] * _GRAY[1]
              + xp_ref[0, 2, :, :] * _GRAY[2])
    else:
        gp = xp_ref[0, 0, :, :]
    gp = gp.astype(jnp.float32)                    # (H+2, W+2)

    # Taps: t{dy}{dx}[i, j] = padded_gray[i + dy, j + dx]  (cross-correlation).
    # All static slices -> cheap lane/sublane shifts in VMEM, no HBM traffic.
    t00 = gp[0:H,     0:W]
    t01 = gp[0:H,     1:W + 1]
    t02 = gp[0:H,     2:W + 2]
    t10 = gp[1:H + 1, 0:W]
    t12 = gp[1:H + 1, 2:W + 2]
    t20 = gp[2:H + 2, 0:W]
    t21 = gp[2:H + 2, 1:W + 1]
    t22 = gp[2:H + 2, 2:W + 2]
    # (center tap t11 has weight 0 in all four kernels)

    # kernel_v  = [[-1,-2,-1],[ 0, 0, 0],[ 1, 2, 1]]
    v_ref[0, 0] = (t20 + 2.0 * t21 + t22) - (t00 + 2.0 * t01 + t02)
    # kernel_h  = [[-1, 0, 1],[-2, 0, 2],[-1, 0, 1]]
    h_ref[0, 0] = (t02 + 2.0 * t12 + t22) - (t00 + 2.0 * t10 + t20)
    # kernel_lu = [[-2,-1, 0],[-1, 0, 1],[ 0, 1, 2]]
    lu_ref[0, 0] = (t12 + t21 + 2.0 * t22) - (2.0 * t00 + t01 + t10)
    # kernel_rd = [[ 0,-1,-2],[ 1, 0,-1],[ 2, 1, 0]]
    rd_ref[0, 0] = (t10 + 2.0 * t20 + t21) - (t01 + 2.0 * t02 + t12)


def asl_layer(x):
    """ASLLayer.forward. x: (N, C, H, W) with C in {1, 3}. Returns 4 tensors
    of shape (N, 1, H, W): (x_v, x_h, x_lu, x_rd)."""
    N, C, H, W = x.shape
    if C == 3:
        to_gray = True
    elif C == 1:
        to_gray = False
    else:
        raise ValueError("ASLLayer expects a 1- or 3-channel input")

    # Single small XLA op before the fused kernel: 1-pixel zero border.
    xp = jnp.pad(x.astype(jnp.float32), ((0, 0), (0, 0), (1, 1), (1, 1)))

    out_sds = jax.ShapeDtypeStruct((N, 1, H, W), jnp.float32)
    in_spec = pl.BlockSpec((1, C, H + 2, W + 2), lambda n: (n, 0, 0, 0))
    out_spec = pl.BlockSpec((1, 1, H, W), lambda n: (n, 0, 0, 0))

    return pl.pallas_call(
        functools.partial(_asl_kernel, H=H, W=W, to_gray=to_gray),
        out_shape=(out_sds, out_sds, out_sds, out_sds),
        grid=(N,),
        in_specs=[in_spec],
        out_specs=(out_spec, out_spec, out_spec, out_spec),
        compiler_params=pltpu.CompilerParams(
            dimension_semantics=("parallel",)),
    )(xp)


# ---------------------------------------------------------------------------
# Pure NumPy reference (mirrors the PyTorch module) for a correctness check.
# ---------------------------------------------------------------------------
def _reference_np(x):
    x = np.asarray(x, np.float32)
    N, C, H, W = x.shape
    if C == 3:
        coeff = np.array([65.738, 129.057, 25.064], np.float32) / np.float32(256.0)
        g = np.einsum("nchw,c->nhw", x, coeff).astype(np.float32)[:, None]
    else:
        g = x
    gp = np.pad(g, ((0, 0), (0, 0), (1, 1), (1, 1)))

    kv = np.array([[-1, -2, -1], [0, 0, 0], [1, 2, 1]], np.float32)
    kh = np.array([[-1, 0, 1], [-2, 0, 2], [-1, 0, 1]], np.float32)
    klu = np.array([[-2, -1, 0], [-1, 0, 1], [0, 1, 2]], np.float32)
    krd = np.array([[0, -1, -2], [1, 0, -1], [2, 1, 0]], np.float32)

    def conv(k):
        out = np.zeros((N, 1, H, W), np.float32)
        for dy in range(3):
            for dx in range(3):
                out += k[dy, dx] * gp[:, :, dy:dy + H, dx:dx + W]
        return out

    return conv(kv), conv(kh), conv(klu), conv(krd)


if __name__ == "__main__":
    key = jax.random.PRNGKey(0)
    N, C, H, W = 2, 3, 16, 16
    x = jax.random.uniform(key, (N, C, H, W), jnp.float32)

    fn = jax.jit(asl_layer)
    outs = fn(x)
    outs = jax.block_until_ready(outs)

    refs = _reference_np(np.asarray(x))
    for o, r in zip(outs, refs):
        assert o.shape == (N, 1, H, W)
        np.testing.assert_allclose(np.asarray(o), r, rtol=1e-4, atol=1e-4)

    print("KERNEL_OK")
</pallas_src>

<mosaic_0001>
module attributes {stable_mosaic.version = 11 : i64} {
  func.func @_asl_kernel(%arg0: i32, %arg1: memref<1x3x18x18xf32, #tpu.memory_space<vmem>>, %arg2: memref<1x1x16x16xf32, #tpu.memory_space<vmem>>, %arg3: memref<1x1x16x16xf32, #tpu.memory_space<vmem>>, %arg4: memref<1x1x16x16xf32, #tpu.memory_space<vmem>>, %arg5: memref<1x1x16x16xf32, #tpu.memory_space<vmem>>) attributes {dimension_semantics = [#tpu.dimension_semantics<parallel>], iteration_bounds = array<i64: 2>, scalar_prefetch = 0 : i64, scratch_operands = 0 : i64, tpu.core_type = #tpu.core_type<tc>, window_params = [{transform_indices = @transform_0, window_bounds = array<i64: 1, 3, 18, 18>}, {transform_indices = @transform_1, window_bounds = array<i64: 1, 1, 16, 16>}, {transform_indices = @transform_2, window_bounds = array<i64: 1, 1, 16, 16>}, {transform_indices = @transform_3, window_bounds = array<i64: 1, 1, 16, 16>}, {transform_indices = @transform_4, window_bounds = array<i64: 1, 1, 16, 16>}]} {
    %c0 = arith.constant 0 : index
    %c0_0 = arith.constant 0 : index
    %c0_1 = arith.constant 0 : index
    %c0_2 = arith.constant 0 : index
    %0 = vector.load %arg1[%c0, %c0_0, %c0_1, %c0_2] : memref<1x3x18x18xf32, #tpu.memory_space<vmem>>, vector<1x1x18x18xf32>
    %1 = vector.shape_cast %0 : vector<1x1x18x18xf32> to vector<18x18xf32>
    %cst = arith.constant 0.256789058 : f32
    %2 = vector.broadcast %cst : f32 to vector<18x18xf32>
    %3 = arith.mulf %1, %2 : vector<18x18xf32>
    %c0_3 = arith.constant 0 : index
    %c1 = arith.constant 1 : index
    %c0_4 = arith.constant 0 : index
    %c0_5 = arith.constant 0 : index
    %4 = vector.load %arg1[%c0_3, %c1, %c0_4, %c0_5] : memref<1x3x18x18xf32, #tpu.memory_space<vmem>>, vector<1x1x18x18xf32>
    %5 = vector.shape_cast %4 : vector<1x1x18x18xf32> to vector<18x18xf32>
    %cst_6 = arith.constant 0.504128933 : f32
    %6 = vector.broadcast %cst_6 : f32 to vector<18x18xf32>
    %7 = arith.mulf %5, %6 : vector<18x18xf32>
    %8 = arith.addf %3, %7 : vector<18x18xf32>
    %c0_7 = arith.constant 0 : index
    %c2 = arith.constant 2 : index
    %c0_8 = arith.constant 0 : index
    %c0_9 = arith.constant 0 : index
    %9 = vector.load %arg1[%c0_7, %c2, %c0_8, %c0_9] : memref<1x3x18x18xf32, #tpu.memory_space<vmem>>, vector<1x1x18x18xf32>
    %10 = vector.shape_cast %9 : vector<1x1x18x18xf32> to vector<18x18xf32>
    %cst_10 = arith.constant 0.0979062467 : f32
    %11 = vector.broadcast %cst_10 : f32 to vector<18x18xf32>
    %12 = arith.mulf %10, %11 : vector<18x18xf32>
    %13 = arith.addf %8, %12 : vector<18x18xf32>
    %14 = vector.extract_strided_slice %13 {offsets = [0, 0], sizes = [16, 16], strides = [1, 1]} : vector<18x18xf32> to vector<16x16xf32>
    %15 = vector.extract_strided_slice %13 {offsets = [0, 1], sizes = [16, 16], strides = [1, 1]} : vector<18x18xf32> to vector<16x16xf32>
    %16 = vector.extract_strided_slice %13 {offsets = [0, 2], sizes = [16, 16], strides = [1, 1]} : vector<18x18xf32> to vector<16x16xf32>
    %17 = vector.extract_strided_slice %13 {offsets = [1, 0], sizes = [16, 16], strides = [1, 1]} : vector<18x18xf32> to vector<16x16xf32>
    %18 = vector.extract_strided_slice %13 {offsets = [1, 2], sizes = [16, 16], strides = [1, 1]} : vector<18x18xf32> to vector<16x16xf32>
    %19 = vector.extract_strided_slice %13 {offsets = [2, 0], sizes = [16, 16], strides = [1, 1]} : vector<18x18xf32> to vector<16x16xf32>
    %20 = vector.extract_strided_slice %13 {offsets = [2, 1], sizes = [16, 16], strides = [1, 1]} : vector<18x18xf32> to vector<16x16xf32>
    %21 = vector.extract_strided_slice %13 {offsets = [2, 2], sizes = [16, 16], strides = [1, 1]} : vector<18x18xf32> to vector<16x16xf32>
    %cst_11 = arith.constant 2.000000e+00 : f32
    %22 = vector.broadcast %cst_11 : f32 to vector<16x16xf32>
    %23 = arith.mulf %22, %20 : vector<16x16xf32>
    %24 = arith.addf %19, %23 : vector<16x16xf32>
    %25 = arith.addf %24, %21 : vector<16x16xf32>
    %cst_12 = arith.constant 2.000000e+00 : f32
    %26 = vector.broadcast %cst_12 : f32 to vector<16x16xf32>
    %27 = arith.mulf %26, %15 : vector<16x16xf32>
    %28 = arith.addf %14, %27 : vector<16x16xf32>
    %29 = arith.addf %28, %16 : vector<16x16xf32>
    %30 = arith.subf %25, %29 : vector<16x16xf32>
    %c0_13 = arith.constant 0 : index
    %c0_14 = arith.constant 0 : index
    %c0_15 = arith.constant 0 : index
    %c0_16 = arith.constant 0 : index
    %31 = vector.load %arg2[%c0_13, %c0_14, %c0_15, %c0_16] : memref<1x1x16x16xf32, #tpu.memory_space<vmem>>, vector<1x1x16x16xf32>
    %32 = vector.shape_cast %31 : vector<1x1x16x16xf32> to vector<16x16xf32>
    %33 = vector.shape_cast %30 : vector<16x16xf32> to vector<1x1x16x16xf32>
    tpu.vector_store %arg2[%c0_13, %c0_14, %c0_15, %c0_16], %33 {strides = array<i32>} : memref<1x1x16x16xf32, #tpu.memory_space<vmem>>, vector<1x1x16x16xf32>,
    %cst_17 = arith.constant 2.000000e+00 : f32
    %34 = vector.broadcast %cst_17 : f32 to vector<16x16xf32>
    %35 = arith.mulf %34, %18 : vector<16x16xf32>
    %36 = arith.addf %16, %35 : vector<16x16xf32>
    %37 = arith.addf %36, %21 : vector<16x16xf32>
    %cst_18 = arith.constant 2.000000e+00 : f32
    %38 = vector.broadcast %cst_18 : f32 to vector<16x16xf32>
    %39 = arith.mulf %38, %17 : vector<16x16xf32>
    %40 = arith.addf %14, %39 : vector<16x16xf32>
    %41 = arith.addf %40, %19 : vector<16x16xf32>
    %42 = arith.subf %37, %41 : vector<16x16xf32>
    %c0_19 = arith.constant 0 : index
    %c0_20 = arith.constant 0 : index
    %c0_21 = arith.constant 0 : index
    %c0_22 = arith.constant 0 : index
    %43 = vector.load %arg3[%c0_19, %c0_20, %c0_21, %c0_22] : memref<1x1x16x16xf32, #tpu.memory_space<vmem>>, vector<1x1x16x16xf32>
    %44 = vector.shape_cast %43 : vector<1x1x16x16xf32> to vector<16x16xf32>
    %45 = vector.shape_cast %42 : vector<16x16xf32> to vector<1x1x16x16xf32>
    tpu.vector_store %arg3[%c0_19, %c0_20, %c0_21, %c0_22], %45 {strides = array<i32>} : memref<1x1x16x16xf32, #tpu.memory_space<vmem>>, vector<1x1x16x16xf32>,
    %46 = arith.addf %18, %20 : vector<16x16xf32>
    %cst_23 = arith.constant 2.000000e+00 : f32
    %47 = vector.broadcast %cst_23 : f32 to vector<16x16xf32>
    %48 = arith.mulf %47, %21 : vector<16x16xf32>
    %49 = arith.addf %46, %48 : vector<16x16xf32>
    %cst_24 = arith.constant 2.000000e+00 : f32
    %50 = vector.broadcast %cst_24 : f32 to vector<16x16xf32>
    %51 = arith.mulf %50, %14 : vector<16x16xf32>
    %52 = arith.addf %51, %15 : vector<16x16xf32>
    %53 = arith.addf %52, %17 : vector<16x16xf32>
    %54 = arith.subf %49, %53 : vector<16x16xf32>
    %c0_25 = arith.constant 0 : index
    %c0_26 = arith.constant 0 : index
    %c0_27 = arith.constant 0 : index
    %c0_28 = arith.constant 0 : index
    %55 = vector.load %arg4[%c0_25, %c0_26, %c0_27, %c0_28] : memref<1x1x16x16xf32, #tpu.memory_space<vmem>>, vector<1x1x16x16xf32>
    %56 = vector.shape_cast %55 : vector<1x1x16x16xf32> to vector<16x16xf32>
    %57 = vector.shape_cast %54 : vector<16x16xf32> to vector<1x1x16x16xf32>
    tpu.vector_store %arg4[%c0_25, %c0_26, %c0_27, %c0_28], %57 {strides = array<i32>} : memref<1x1x16x16xf32, #tpu.memory_space<vmem>>, vector<1x1x16x16xf32>,
    %cst_29 = arith.constant 2.000000e+00 : f32
    %58 = vector.broadcast %cst_29 : f32 to vector<16x16xf32>
    %59 = arith.mulf %58, %19 : vector<16x16xf32>
    %60 = arith.addf %17, %59 : vector<16x16xf32>
    %61 = arith.addf %60, %20 : vector<16x16xf32>
    %cst_30 = arith.constant 2.000000e+00 : f32
    %62 = vector.broadcast %cst_30 : f32 to vector<16x16xf32>
    %63 = arith.mulf %62, %16 : vector<16x16xf32>
    %64 = arith.addf %15, %63 : vector<16x16xf32>
    %65 = arith.addf %64, %18 : vector<16x16xf32>
    %66 = arith.subf %61, %65 : vector<16x16xf32>
    %c0_31 = arith.constant 0 : index
    %c0_32 = arith.constant 0 : index
    %c0_33 = arith.constant 0 : index
    %c0_34 = arith.constant 0 : index
    %67 = vector.load %arg5[%c0_31, %c0_32, %c0_33, %c0_34] : memref<1x1x16x16xf32, #tpu.memory_space<vmem>>, vector<1x1x16x16xf32>
    %68 = vector.shape_cast %67 : vector<1x1x16x16xf32> to vector<16x16xf32>
    %69 = vector.shape_cast %66 : vector<16x16xf32> to vector<1x1x16x16xf32>
    tpu.vector_store %arg5[%c0_31, %c0_32, %c0_33, %c0_34], %69 {strides = array<i32>} : memref<1x1x16x16xf32, #tpu.memory_space<vmem>>, vector<1x1x16x16xf32>,
    return
  }
  func.func @transform_0(%arg0: i32) -> (i32, i32, i32, i32) {
    %c0_i32 = arith.constant 0 : i32
    %c0_i32_0 = arith.constant 0 : i32
    %c0_i32_1 = arith.constant 0 : i32
    %c0_i32_2 = arith.constant 0 : i32
    return %arg0, %c0_i32, %c0_i32_0, %c0_i32_1 : i32, i32, i32, i32
  }
  func.func @transform_1(%arg0: i32) -> (i32, i32, i32, i32) {
    %c0_i32 = arith.constant 0 : i32
    %c0_i32_0 = arith.constant 0 : i32
    %c0_i32_1 = arith.constant 0 : i32
    %c0_i32_2 = arith.constant 0 : i32
    return %arg0, %c0_i32, %c0_i32_0, %c0_i32_1 : i32, i32, i32, i32
  }
  func.func @transform_2(%arg0: i32) -> (i32, i32, i32, i32) {
    %c0_i32 = arith.constant 0 : i32
    %c0_i32_0 = arith.constant 0 : i32
    %c0_i32_1 = arith.constant 0 : i32
    %c0_i32_2 = arith.constant 0 : i32
    return %arg0, %c0_i32, %c0_i32_0, %c0_i32_1 : i32, i32, i32, i32
  }
  func.func @transform_3(%arg0: i32) -> (i32, i32, i32, i32) {
    %c0_i32 = arith.constant 0 : i32
    %c0_i32_0 = arith.constant 0 : i32
    %c0_i32_1 = arith.constant 0 : i32
    %c0_i32_2 = arith.constant 0 : i32
    return %arg0, %c0_i32, %c0_i32_0, %c0_i32_1 : i32, i32, i32, i32
  }
  func.func @transform_4(%arg0: i32) -> (i32, i32, i32, i32) {
    %c0_i32 = arith.constant 0 : i32
    %c0_i32_0 = arith.constant 0 : i32
    %c0_i32_1 = arith.constant 0 : i32
    %c0_i32_2 = arith.constant 0 : i32
    return %arg0, %c0_i32, %c0_i32_0, %c0_i32_1 : i32, i32, i32, i32
  }
}

</mosaic_0001>

<llo_original>
// kernel: asl_layer.1
$region0: #{asl_layer.1}
  #allocation0 [shape = 'u32[]', space=smem, size = 0x4, offset = 0x4, fixed_abs, tag = 'smem constant byte address 0x4 - core index']
  #allocation1 [shape = 'u32[72,128]{1,0:T(1,128)}', space=vmem, size = 0x9000, scoped, tag = 'internal scratch']
  %s0 = inlined_call_operand.vmem [shape: f32[2,3,18,18], index: 0, kind: input, shape index: {}]
  %s1 = inlined_call_operand.hbm [shape: f32[2,1,16,16], index: 1, kind: output, shape index: {0}]
  %s2 = inlined_call_operand.hbm [shape: f32[2,1,16,16], index: 2, kind: output, shape index: {1}]
  %s3 = inlined_call_operand.hbm [shape: f32[2,1,16,16], index: 3, kind: output, shape index: {2}]
  %s4 = inlined_call_operand.hbm [shape: f32[2,1,16,16], index: 4, kind: output, shape index: {3}]
  %5 = xla_tuple %s1, %s2, %s3, %s4
  %s6 = sld [smem:[#allocation0]]
  $region61: #{asl_layer.1} parent=0
    _
  %s8 = ssub.s32 1, %s6
  %s9 = scalar_select 0, %s8, %s6
  $region1: #{asl_layer.1} parent=0
    #allocation2 [shape = 'u8[16384]{0}', space=vmem, size = 0x4000, scoped, tag = 'output window, operand 0']
    #allocation3 [shape = 's32[2]{0}', space=sflag, size = 0x8, scoped, tag = 'scoped memory for asl_layer.1']
    #allocation4 [shape = 'u8[16384]{0}', space=vmem, size = 0x4000, scoped, tag = 'output window, operand 1']
    #allocation5 [shape = 's32[2]{0}', space=sflag, size = 0x8, scoped, tag = 'scoped memory for asl_layer.1']
    #allocation6 [shape = 'u8[16384]{0}', space=vmem, size = 0x4000, scoped, tag = 'output window, operand 2']
    #allocation7 [shape = 'u8[16384]{0}', space=vmem, size = 0x4000, scoped, tag = 'output window, operand 3']
    #allocation8 [shape = 's32[2]{0}', space=sflag, size = 0x8, scoped, tag = 'scoped memory for asl_layer.1']
    %10 = vsyncpa [#allocation3], 0
    %s11 = scalar_lea.sflag [#allocation3], 1
    %12 = vsyncpa %s11, 0
    %13 = vsyncpa [#allocation5], 0
    %s14 = scalar_lea.sflag [#allocation5], 1
    %15 = vsyncpa %s14, 0
    %16 = vsyncpa [#allocation8], 0
    %s17 = scalar_lea.sflag [#allocation8], 1
    %18 = vsyncpa %s17, 0
    loop: start=0, step=1, limit=4
    $region2: #{asl_layer.1} parent=1 // loop_pre_header
      _
    $region3: #{asl_layer.1} parent=1 // loop_header
      %s20 = sphi 0, %s24
      %p21 = scmp.ge.s32.totalorder %s20, 4
      %s30 = sphi 0, %s32
      %s33 = sphi 0, %s30
      %s34 = sphi 0, %s33
      %s50 = sphi 0, %s34
      %s56 = sphi 0, %s58
      %s59 = sphi 0, %s56
      %s60 = sphi 0, %s59
      %s76 = sphi 0, %s60
      %s82 = sphi 0, %s84
      %s85 = sphi 0, %s82
      %s86 = sphi 0, %s85
      %s102 = sphi 0, %s86
      %s108 = sphi 0, %s110
      %s111 = sphi 0, %s108
      %s112 = sphi 0, %s111
      %s128 = sphi 0, %s112
      %s134 = sphi 0, %s136
      %s137 = sphi 0, %s134
      %s138 = sphi 0, %s137
      %s154 = sphi 0, %s138
    $region4: #{asl_layer.1} parent=1 // loop_header_branch
      %23 = sbr.rel (%p21) target = $region8
    $region5: #{asl_layer.1} parent=1 // loop_body
      %s25 = ssub.s32 %s20, 1
      %s26 = ssub.s32 %s20, 2
      %s27 = sadd.s32 %s20, 1
      %s28 = ssub.s32 %s20, %s27
      %p29 = scmp.eq.s32.totalorder %s28, 0
      %s31 = sadd.s32 %s30, 1
      %s32 = scalar_select %p29, %s30, %s31
      %p35 = pneg %p29
      %p36 = scmp.eq.s32.totalorder %s20, 1
      %p37 = por %p35, %p36
      %p38 = scmp.ne.s32.totalorder %s30, %s33
      %p39 = scmp.eq.s32.totalorder %s20, 0
      %p40 = por %p38, %p39
      %p41 = scmp.ne.s32.totalorder %s30, %s33
      %p42 = scmp.eq.s32.totalorder %s25, 1
      %p43 = por %p41, %p42
      %p44 = scmp.ne.s32.totalorder %s33, %s34
      %p45 = scmp.eq.s32.totalorder %s25, 0
      %p46 = por %p44, %p45
      %p47 = scmp.ne.s32.totalorder %s33, %s34
      %p48 = scmp.eq.s32.totalorder %s26, 1
      %p49 = por %p47, %p48
      %p51 = scmp.ne.s32.totalorder %s34, %s50
      %p52 = scmp.eq.s32.totalorder %s26, 0
      %p53 = por %p51, %p52
      %s54 = ssub.s32 %s20, %s27
      %p55 = scmp.eq.s32.totalorder %s54, 0
      %s57 = sadd.s32 %s56, 1
      %s58 = scalar_select %p55, %s56, %s57
      %p61 = pneg %p55
      %p62 = scmp.eq.s32.totalorder %s20, 1
      %p63 = por %p61, %p62
      %p64 = scmp.ne.s32.totalorder %s56, %s59
      %p65 = scmp.eq.s32.totalorder %s20, 0
      %p66 = por %p64, %p65
      %p67 = scmp.ne.s32.totalorder %s56, %s59
      %p68 = scmp.eq.s32.totalorder %s25, 1
      %p69 = por %p67, %p68
      %p70 = scmp.ne.s32.totalorder %s59, %s60
      %p71 = scmp.eq.s32.totalorder %s25, 0
      %p72 = por %p70, %p71
      %p73 = scmp.ne.s32.totalorder %s59, %s60
      %p74 = scmp.eq.s32.totalorder %s26, 1
      %p75 = por %p73, %p74
      %p77 = scmp.ne.s32.totalorder %s60, %s76
      %p78 = scmp.eq.s32.totalorder %s26, 0
      %p79 = por %p77, %p78
      %s80 = ssub.s32 %s20, %s27
      %p81 = scmp.eq.s32.totalorder %s80, 0
      %s83 = sadd.s32 %s82, 1
      %s84 = scalar_select %p81, %s82, %s83
      %p87 = pneg %p81
      %p88 = scmp.eq.s32.totalorder %s20, 1
      %p89 = por %p87, %p88
      %p90 = scmp.ne.s32.totalorder %s82, %s85
      %p91 = scmp.eq.s32.totalorder %s20, 0
      %p92 = por %p90, %p91
      %p93 = scmp.ne.s32.totalorder %s82, %s85
      %p94 = scmp.eq.s32.totalorder %s25, 1
      %p95 = por %p93, %p94
      %p96 = scmp.ne.s32.totalorder %s85, %s86
      %p97 = scmp.eq.s32.totalorder %s25, 0
      %p98 = por %p96, %p97
      %p99 = scmp.ne.s32.totalorder %s85, %s86
      %p100 = scmp.eq.s32.totalorder %s26, 1
      %p101 = por %p99, %p100
      %p103 = scmp.ne.s32.totalorder %s86, %s102
      %p104 = scmp.eq.s32.totalorder %s26, 0
      %p105 = por %p103, %p104
      %s106 = ssub.s32 %s20, %s27
      %p107 = scmp.eq.s32.totalorder %s106, 0
      %s109 = sadd.s32 %s108, 1
      %s110 = scalar_select %p107, %s108, %s109
      %p113 = pneg %p107
      %p114 = scmp.eq.s32.totalorder %s20, 1
      %p115 = por %p113, %p114
      %p116 = scmp.ne.s32.totalorder %s108, %s111
      %p117 = scmp.eq.s32.totalorder %s20, 0
      %p118 = por %p116, %p117
      %p119 = scmp.ne.s32.totalorder %s108, %s111
      %p120 = scmp.eq.s32.totalorder %s25, 1
      %p121 = por %p119, %p120
      %p122 = scmp.ne.s32.totalorder %s111, %s112
      %p123 = scmp.eq.s32.totalorder %s25, 0
      %p124 = por %p122, %p123
      %p125 = scmp.ne.s32.totalorder %s111, %s112
      %p126 = scmp.eq.s32.totalorder %s26, 1
      %p127 = por %p125, %p126
      %p129 = scmp.ne.s32.totalorder %s112, %s128
      %p130 = scmp.eq.s32.totalorder %s26, 0
      %p131 = por %p129, %p130
      %s132 = ssub.s32 %s20, %s27
      %p133 = scmp.eq.s32.totalorder %s132, 0
      %s135 = sadd.s32 %s134, 1
      %s136 = scalar_select %p133, %s134, %s135
      %p139 = pneg %p133
      %p140 = scmp.eq.s32.totalorder %s20, 1
      %p141 = por %p139, %p140
      %p142 = scmp.ne.s32.totalorder %s134, %s137
      %p143 = scmp.eq.s32.totalorder %s20, 0
      %p144 = por %p142, %p143
      %p145 = scmp.ne.s32.totalorder %s134, %s137
      %p146 = scmp.eq.s32.totalorder %s25, 1
      %p147 = por %p145, %p146
      %p148 = scmp.ne.s32.totalorder %s137, %s138
      %p149 = scmp.eq.s32.totalorder %s25, 0
      %p150 = por %p148, %p149
      %p151 = scmp.ne.s32.totalorder %s137, %s138
      %p152 = scmp.eq.s32.totalorder %s26, 1
      %p153 = por %p151, %p152
      %p155 = scmp.ne.s32.totalorder %s138, %s154
      %p156 = scmp.eq.s32.totalorder %s26, 0
      %p157 = por %p155, %p156
      %p158 = scmp.le.s32.totalorder 1, %s20
      %p159 = scmp.lt.s32.totalorder %s20, 3
      %p160 = pnand %p158, %p159
      %p161 = pneg %p160
      // Predicated region
      $region9: #{asl_layer.1} parent=5 // pred_check
        _
      $region10: #{asl_layer.1} parent=5 // pred_check_branch
        %163 = sbr.rel (%p160) target = $region12
      $region11: #{asl_layer.1} parent=5 // pred_region
        %s164 = ssub.s32 %s20, 1
      $region12: #{asl_layer.1} parent=5 // pred_fallthru
        _
      %p165 = scmp.lt.s32.totalorder %s20, 2
      // Predicated region
      $region13: #{asl_layer.1} parent=5 // pred_check
        %p166 = pneg %p165
      $region14: #{asl_layer.1} parent=5 // pred_check_branch
        %168 = sbr.rel (%p166) target = $region16
      $region15: #{asl_layer.1} parent=5 // pred_region
        // Predicated region
        $region17: #{asl_layer.1} parent=15 // pred_check
          %p169 = pneg %p40
        $region18: #{asl_layer.1} parent=15 // pred_check_branch
          %171 = sbr.rel (%p169) target = $region20
        $region19: #{asl_layer.1} parent=15 // pred_region
          %p172 = scmp.lt.s32.totalorder %s20, 1
          %s173 = scalar_select %p172, %s20, 1
          %s174 = smul.addr %s173, 9
          %s175 = smul.addr %s174, 8
          %s176 = scalar_lea.vmem %s0, %s175
        $region20: #{asl_layer.1} parent=15 // pred_fallthru
          _
      $region16: #{asl_layer.1} parent=5 // pred_fallthru
        _
      %p177 = scmp.le.s32.totalorder 1, %s20
      %p178 = scmp.lt.s32.totalorder %s20, 3
      %p179 = pnand %p177, %p178
      %p180 = pneg %p179
      // Predicated region
      $region21: #{asl_layer.1} parent=5 // pred_check
        _
      $region22: #{asl_layer.1} parent=5 // pred_check_branch
        %182 = sbr.rel (%p179) target = $region24
      $region23: #{asl_layer.1} parent=5 // pred_region
        %s183 = ssub.s32 %s20, 1
        %p184 = scmp.lt.s32.totalorder %s25, 1
        %s185 = scalar_select %p184, %s25, 1
        %s186 = smul.addr %s185, 9
        %s187 = smul.addr %s186, 8
        %s188 = scalar_lea.vmem %s0, %s187
        %p189 = pneg %p46
        %p190 = pneg %p43
        %p191 = pneg %p72
        %p192 = pneg %p69
        %s193 = sand.u32 %s59, 1
        %s194 = scalar_lea.sflag [#allocation3], %s193
        %s195 = sand.u32 %s59, 1
        %s196 = smul.addr %s195, 16
        %s197 = scalar_lea.vmem [#allocation2], %s196
        %p198 = pneg %p98
        %p199 = pneg %p95
        %s200 = sand.u32 %s25, 1
        %s201 = scalar_lea.sflag [#allocation5], %s200
        %s202 = sand.u32 %s85, 1
        %s203 = smul.addr %s202, 16
        %s204 = scalar_lea.vmem [#allocation4], %s203
        %p205 = pneg %p124
        %p206 = pneg %p121
        %s207 = sand.u32 %s25, 1
        %s208 = scalar_lea.sflag [#allocation5], %s207
        %s209 = sand.u32 %s111, 1
        %s210 = smul.addr %s209, 16
        %s211 = scalar_lea.vmem [#allocation6], %s210
        %p212 = pneg %p150
        %p213 = pneg %p147
        %s214 = sand.u32 %s137, 1
        %s215 = scalar_lea.sflag [#allocation8], %s214
        %s216 = sand.u32 %s137, 1
        %s217 = smul.addr %s216, 16
        %s218 = scalar_lea.vmem [#allocation7], %s217
        %p219 = scmp.lt.s32.totalorder %s25, 1
        %s220 = scalar_select %p219, %s25, 1
        %s221 = smul.addr %s220, 9
        %s222 = smul.addr %s221, 8
        %s223 = scalar_lea.vmem %s0, %s222
        %v224 = vld [vmem:[%s223] sm:$0xff]
        %v225 = vld [vmem:[%s223 + $0x8] sm:$0xff]
        %v226 = vld [vmem:[%s223 + $0x10] sm:$0x3]
        %v227 = vmul.f32 %v224, 0.25678906
        %v228 = vmul.f32 %v225, 0.25678906
        %v229 = vmul.f32 %v226, 0.25678906
        %s230 = scalar_lea.vmem %s223, 24
        %v231 = vld [vmem:[%s230] sm:$0xff]
        %v232 = vld [vmem:[%s230 + $0x8] sm:$0xff]
        %v233 = vld [vmem:[%s230 + $0x10] sm:$0x3]
        %v234 = vmul.f32 %v231, 0.50412893
        %v235 = vmul.f32 %v232, 0.50412893
        %v236 = vmul.f32 %v233, 0.50412893
        %v237 = vadd.f32 %v227, %v234
        %v238 = vadd.f32 %v228, %v235
        %v239 = vadd.f32 %v229, %v236
        %s240 = scalar_lea.vmem %s223, 48
        %v241 = vld [vmem:[%s240] sm:$0xff]
        %v242 = vld [vmem:[%s240 + $0x8] sm:$0xff]
        %v243 = vld [vmem:[%s240 + $0x10] sm:$0x3]
        %v244 = vmul.f32 %v241, 0.09790625
        %v245 = vmul.f32 %v242, 0.09790625
        %v246 = vmul.f32 %v243, 0.09790625
        %v247 = vadd.f32 %v237, %v244
        %v248 = vadd.f32 %v238, %v245
        %v249 = vadd.f32 %v239, %v246
        %v250 = vmul.f32 %v247, 2.0
        %v251 = vmul.f32 %v248, 2.0
        %v252 = vmul.f32 %v249, 2.0
        %256 = vrot.lane.b32.xlu0 %v250, 127
        %v257 = vpop.permute.xlu0 %256
        %258 = vrot.lane.b32.xlu0 %v251, 127
        %v259 = vpop.permute.xlu0 %258
        %260 = vrot.lane.b32.xlu0 %v252, 127
        %v261 = vpop.permute.xlu0 %260
        %v265 = vadd.f32 %v247, %v257
        %v266 = vadd.f32 %v248, %v259
        %v267 = vadd.f32 %v249, %v261
        %271 = vrot.lane.b32.xlu0 %v247, 126
        %v272 = vpop.permute.xlu0 %271
        %273 = vrot.lane.b32.xlu0 %v248, 126
        %v274 = vpop.permute.xlu0 %273
        %275 = vrot.lane.b32.xlu0 %v249, 126
        %v276 = vpop.permute.xlu0 %275
        %v280 = vadd.f32 %v265, %v272
        %v281 = vadd.f32 %v266, %v274
        %v282 = vadd.f32 %v267, %v276
        %vm285 = vcmask 1041408
        %v286 = vrot.slane %v280, 6
        %v287 = vrot.slane %v281, 6
        %v288 = vsel %vm285, %v286, %v287
        %v292 = vsub.f32 %v280, %v286
        %v293 = vsub.f32 %v281, %v288
        %v294 = vsub.f32 %v282, %v287
        %vm295 = vcmask 130050
        %296 = vst.msk [vmem:[%s197 - $0x2] sm:$0xfc] %vm295, %v292
        %vm297 = vcmask 130048
        %298 = vst.msk [vmem:[%s197 + $0x6] sm:$0xff] %vm297, %v293
        %vm299 = vcmask 123904
        %300 = vst.msk [vmem:[%s197 + $0xe] sm:$0x3] %vm299, %v294
        %vm301 = vcmask 1046528
        %v302 = vrot.slane %v250, 1
        %v303 = vrot.slane %v251, 1
        %v304 = vsel %vm301, %v302, %v303
        %v305 = vrot.slane %v252, 1
        %v306 = vsel %vm301, %v303, %v305
        %v309 = vadd.f32 %v247, %v304
        %v310 = vadd.f32 %v248, %v306
        %vm311 = vcmask 1045504
        %v312 = vrot.slane %v247, 2
        %v313 = vrot.slane %v248, 2
        %v314 = vsel %vm311, %v312, %v313
        %v315 = vrot.slane %v249, 2
        %v316 = vsel %vm311, %v313, %v315
        %v319 = vadd.f32 %v309, %v314
        %v320 = vadd.f32 %v310, %v316
        %323 = vrot.lane.b32.xlu0 %v319, 2
        %v324 = vpop.permute.xlu0 %323
        %325 = vrot.lane.b32.xlu0 %v320, 2
        %v326 = vpop.permute.xlu0 %325
        %v329 = vsub.f32 %v319, %v324
        %v330 = vsub.f32 %v320, %v326
        %333 = vrot.lane.b32.xlu0 %v329, 126
        %v334 = vpop.permute.xlu0 %333
        %335 = vrot.lane.b32.xlu0 %v330, 126
        %v336 = vpop.permute.xlu0 %335
        %339 = vst.msk [vmem:[%s204] sm:$0xff] %vm297, %v334
        %340 = vst.msk [vmem:[%s204 + $0x8] sm:$0xff] %vm297, %v336
        %v341 = vrot.slane %v247, 1
        %v342 = vrot.slane %v248, 1
        %v343 = vsel %vm301, %v341, %v342
        %v344 = vrot.slane %v249, 1
        %v345 = vsel %vm301, %v342, %v344
        %346 = vrot.lane.b32.xlu0 %v343, 1
        %v347 = vpop.permute.xlu0 %346
        %348 = vrot.lane.b32.xlu0 %v345, 1
        %v349 = vpop.permute.xlu0 %348
        %350 = vrot.lane.b32.xlu0 %v344, 1
        %v351 = vpop.permute.xlu0 %350
        %v355 = vadd.f32 %v247, %v347
        %v356 = vadd.f32 %v248, %v349
        %v357 = vadd.f32 %v249, %v351
        %v359 = vadd.f32 %v355, %v304
        %v360 = vadd.f32 %v356, %v306
        %v361 = vadd.f32 %v357, %v305
        %362 = vrot.lane.b32.xlu0 %v247, 127
        %v363 = vpop.permute.xlu0 %362
        %364 = vrot.lane.b32.xlu0 %v248, 127
        %v365 = vpop.permute.xlu0 %364
        %v368 = vadd.f32 %v250, %v363
        %v369 = vadd.f32 %v251, %v365
        %v372 = vadd.f32 %v368, %v343
        %v373 = vadd.f32 %v369, %v345
        %vm376 = vcmask 1040384
        %v377 = vrot.slane %v372, 7
        %v378 = vrot.slane %v373, 7
        %v379 = vsel %vm376, %v377, %v378
        %380 = vrot.lane.b32.xlu0 %v377, 2
        %v381 = vpop.permute.xlu0 %380
        %382 = vrot.lane.b32.xlu0 %v379, 2
        %v383 = vpop.permute.xlu0 %382
        %384 = vrot.lane.b32.xlu0 %v378, 2
        %v385 = vpop.permute.xlu0 %384
        %v389 = vsub.f32 %v359, %v381
        %v390 = vsub.f32 %v360, %v383
        %v391 = vsub.f32 %v361, %v385
        %395 = vrot.lane.b32.xlu0 %v389, 126
        %v396 = vpop.permute.xlu0 %395
        %397 = vrot.lane.b32.xlu0 %v390, 126
        %v398 = vpop.permute.xlu0 %397
        %399 = vrot.lane.b32.xlu0 %v391, 126
        %v400 = vpop.permute.xlu0 %399
        %vm404 = vcmask 130049
        %405 = vst.msk [vmem:[%s211 - $0x1] sm:$0xfe] %vm404, %v396
        %406 = vst.msk [vmem:[%s211 + $0x7] sm:$0xff] %vm297, %v398
        %vm407 = vcmask 122880
        %408 = vst.msk [vmem:[%s211 + $0xf] sm:$0x1] %vm407, %v400
        %v409 = vadd.f32 %v249, %v305
        %410 = vrot.lane.b32.xlu0 %v343, 127
        %v411 = vpop.permute.xlu0 %410
        %412 = vrot.lane.b32.xlu0 %v345, 127
        %v413 = vpop.permute.xlu0 %412
        %414 = vrot.lane.b32.xlu0 %v344, 127
        %v415 = vpop.permute.xlu0 %414
        %v419 = vadd.f32 %v309, %v411
        %v420 = vadd.f32 %v310, %v413
        %v421 = vadd.f32 %v409, %v415
        %v422 = vadd.f32 %v265, %v411
        %v423 = vadd.f32 %v266, %v413
        %v426 = vrot.slane %v422, 7
        %v427 = vrot.slane %v423, 7
        %v428 = vsel %vm376, %v426, %v427
        %429 = vrot.lane.b32.xlu0 %v426, 127
        %v430 = vpop.permute.xlu0 %429
        %431 = vrot.lane.b32.xlu0 %v428, 127
        %v432 = vpop.permute.xlu0 %431
        %433 = vrot.lane.b32.xlu0 %v427, 127
        %v434 = vpop.permute.xlu0 %433
        %v438 = vsub.f32 %v419, %v430
        %v439 = vsub.f32 %v420, %v432
        %v440 = vsub.f32 %v421, %v434
        %441 = vst.msk [vmem:[%s218 - $0x1] sm:$0xfe] %vm404, %v438
        %442 = vst.msk [vmem:[%s218 + $0x7] sm:$0xff] %vm297, %v439
        %443 = vst.msk [vmem:[%s218 + $0xf] sm:$0x1] %vm407, %v440
        %s444 = sand.u32 %s59, 1
        %s445 = scalar_lea.sflag [#allocation3], %s444
        %s446 = sand.u32 %s59, 1
        %s447 = smul.addr %s446, 16
        %s448 = scalar_lea.vmem [#allocation2], %s447
        %s449 = sand.u32 %s25, 1
        %s450 = scalar_lea.sflag [#allocation5], %s449
        %s451 = sand.u32 %s85, 1
        %s452 = smul.addr %s451, 16
        %s453 = scalar_lea.vmem [#allocation4], %s452
        %s454 = sand.u32 %s25, 1
        %s455 = scalar_lea.sflag [#allocation5], %s454
        %s456 = sand.u32 %s111, 1
        %s457 = smul.addr %s456, 16
        %s458 = scalar_lea.vmem [#allocation6], %s457
        %s459 = sand.u32 %s137, 1
        %s460 = scalar_lea.sflag [#allocation8], %s459
        %s461 = sand.u32 %s137, 1
        %s462 = smul.addr %s461, 16
        %s463 = scalar_lea.vmem [#allocation7], %s462
        // Predicated region
        $region25: #{asl_layer.1} parent=23 // pred_check
          %p464 = pneg %p69
        $region26: #{asl_layer.1} parent=23 // pred_check_branch
          %466 = sbr.rel (%p464) target = $region28
        $region27: #{asl_layer.1} parent=23 // pred_region
          %468 = vsyncadd %s445, 0
          %s469 = smul.addr %s25, 2
          %s470 = smul.addr %s469, 8
          %s471 = scalar_lea.hbm %s1, %s470
          %s472 = sshll.u32 %s448, 4
          %s473 = int_to_ptr.vmem [resolvable:$true] %s472
          %s474 = sshll.u32 %s471, 4
          %s475 = int_to_ptr.hbm [resolvable:$true] %s474
          %480 = dma.vmem_to_hbm [thread:$0]  %s473, 256, %s475, %s445, 128, 128, 8
        $region28: #{asl_layer.1} parent=23 // pred_fallthru
          _
        // Predicated region
        $region29: #{asl_layer.1} parent=23 // pred_check
          %p481 = pneg %p95
        $region30: #{asl_layer.1} parent=23 // pred_check_branch
          %483 = sbr.rel (%p481) target = $region32
        $region31: #{asl_layer.1} parent=23 // pred_region
          %485 = vsyncadd %s450, 0
          %s486 = smul.addr %s25, 2
          %s487 = smul.addr %s486, 8
          %s488 = scalar_lea.hbm %s2, %s487
          %s489 = sshll.u32 %s453, 4
          %s490 = int_to_ptr.vmem [resolvable:$true] %s489
          %s491 = sshll.u32 %s488, 4
          %s492 = int_to_ptr.hbm [resolvable:$true] %s491
          %497 = dma.vmem_to_hbm [thread:$0]  %s490, 256, %s492, %s450, 128, 128, 8
        $region32: #{asl_layer.1} parent=23 // pred_fallthru
          _
        // Predicated region
        $region33: #{asl_layer.1} parent=23 // pred_check
          %p498 = pneg %p121
        $region34: #{asl_layer.1} parent=23 // pred_check_branch
          %500 = sbr.rel (%p498) target = $region36
        $region35: #{asl_layer.1} parent=23 // pred_region
          %502 = vsyncadd %s455, 0
          %s503 = smul.addr %s25, 2
          %s504 = smul.addr %s503, 8
          %s505 = scalar_lea.hbm %s3, %s504
          %s506 = sshll.u32 %s458, 4
          %s507 = int_to_ptr.vmem [resolvable:$true] %s506
          %s508 = sshll.u32 %s505, 4
          %s509 = int_to_ptr.hbm [resolvable:$true] %s508
          %514 = dma.vmem_to_hbm [thread:$0]  %s507, 256, %s509, %s455, 128, 128, 8
        $region36: #{asl_layer.1} parent=23 // pred_fallthru
          _
        // Predicated region
        $region37: #{asl_layer.1} parent=23 // pred_check
          %p515 = pneg %p147
        $region38: #{asl_layer.1} parent=23 // pred_check_branch
          %517 = sbr.rel (%p515) target = $region40
        $region39: #{asl_layer.1} parent=23 // pred_region
          %519 = vsyncadd %s460, 0
          %s520 = smul.addr %s25, 2
          %s521 = smul.addr %s520, 8
          %s522 = scalar_lea.hbm %s4, %s521
          %s523 = sshll.u32 %s463, 4
          %s524 = int_to_ptr.vmem [resolvable:$true] %s523
          %s525 = sshll.u32 %s522, 4
          %s526 = int_to_ptr.hbm [resolvable:$true] %s525
          %531 = dma.vmem_to_hbm [thread:$0]  %s524, 256, %s526, %s460, 128, 128, 8
        $region40: #{asl_layer.1} parent=23 // pred_fallthru
          _
      $region24: #{asl_layer.1} parent=5 // pred_fallthru
        _
      %p532 = scmp.le.s32.totalorder 2, %s20
      // Predicated region
      $region41: #{asl_layer.1} parent=5 // pred_check
        %p533 = pneg %p532
      $region42: #{asl_layer.1} parent=5 // pred_check_branch
        %535 = sbr.rel (%p533) target = $region44
      $region43: #{asl_layer.1} parent=5 // pred_region
        %s536 = ssub.s32 %s20, 2
        // Predicated region
        $region45: #{asl_layer.1} parent=43 // pred_check
          %p537 = pneg %p75
        $region46: #{asl_layer.1} parent=43 // pred_check_branch
          %539 = sbr.rel (%p537) target = $region48
        $region47: #{asl_layer.1} parent=43 // pred_region
          %s540 = sand.u32 %s60, 1
          %s541 = scalar_lea.sflag [#allocation3], %s540
          %s542 = sand.u32 %s60, 1
          %s543 = smul.addr %s542, 16
          %s544 = scalar_lea.vmem [#allocation2], %s543
          %546 = dma.done %s541, 256
        $region48: #{asl_layer.1} parent=43 // pred_fallthru
          _
        // Predicated region
        $region49: #{asl_layer.1} parent=43 // pred_check
          %p547 = pneg %p101
        $region50: #{asl_layer.1} parent=43 // pred_check_branch
          %549 = sbr.rel (%p547) target = $region52
        $region51: #{asl_layer.1} parent=43 // pred_region
          %s550 = sand.u32 %s26, 1
          %s551 = scalar_lea.sflag [#allocation5], %s550
          %s552 = sand.u32 %s86, 1
          %s553 = smul.addr %s552, 16
          %s554 = scalar_lea.vmem [#allocation4], %s553
          %556 = dma.done %s551, 256
        $region52: #{asl_layer.1} parent=43 // pred_fallthru
          _
        // Predicated region
        $region53: #{asl_layer.1} parent=43 // pred_check
          %p557 = pneg %p127
        $region54: #{asl_layer.1} parent=43 // pred_check_branch
          %559 = sbr.rel (%p557) target = $region56
        $region55: #{asl_layer.1} parent=43 // pred_region
          %s560 = sand.u32 %s26, 1
          %s561 = scalar_lea.sflag [#allocation5], %s560
          %s562 = sand.u32 %s112, 1
          %s563 = smul.addr %s562, 16
          %s564 = scalar_lea.vmem [#allocation6], %s563
          %566 = dma.done %s561, 256
        $region56: #{asl_layer.1} parent=43 // pred_fallthru
          _
        // Predicated region
        $region57: #{asl_layer.1} parent=43 // pred_check
          %p567 = pneg %p153
        $region58: #{asl_layer.1} parent=43 // pred_check_branch
          %569 = sbr.rel (%p567) target = $region60
        $region59: #{asl_layer.1} parent=43 // pred_region
          %s570 = sand.u32 %s138, 1
          %s571 = scalar_lea.sflag [#allocation8], %s570
          %s572 = sand.u32 %s138, 1
          %s573 = smul.addr %s572, 16
          %s574 = scalar_lea.vmem [#allocation7], %s573
          %576 = dma.done %s571, 256
        $region60: #{asl_layer.1} parent=43 // pred_fallthru
          _
      $region44: #{asl_layer.1} parent=5 // pred_fallthru
        _
    $region6: #{asl_layer.1} parent=1 // loop_footer
      %s24 = sadd.s32 1, %s20
    $region7: #{asl_layer.1} parent=1 // loop_footer_branch
      %19 = sbr.rel target = $region3
    $region8: #{asl_layer.1} parent=1 // loop_exit
      _
    %577 = vsyncpa [#allocation3], 1
    %s578 = scalar_lea.sflag [#allocation3], 1
    %579 = vsyncpa %s578, 1
    %580 = vsyncpa [#allocation5], 1
    %s581 = scalar_lea.sflag [#allocation5], 1
    %582 = vsyncpa %s581, 1
    %583 = vsyncpa [#allocation8], 1
    %s584 = scalar_lea.sflag [#allocation8], 1
    %585 = vsyncpa %s584, 1

</llo_original>
